<compile_context>
chip_gen: v7x
topology: tpu7x:2x2x1
jax: 0.10.0
libtpu: 0.0.40
codegen_flags: <defaults>
</compile_context>

<pallas_src>
import functools

import jax
import jax.numpy as jnp
import numpy as np
from jax import lax
from jax.experimental import pallas as pl
from jax.experimental.pallas import tpu as pltpu

LANES = 128            # lane width: batch elements live on the fast axis
TILE_ROWS_MAX = 1024   # rows per grid step (1024 x 128 f32 = 512 KiB / buffer)
CHUNK_ROWS = 64        # in-kernel chunk: bounds live vregs (~32) -> no spills
HIDDEN = 6             # fc1 width


def _round_up(a, b):
    return ((a + b - 1) // b) * b


def _make_kernel(signs, n_chunks, chunk_rows):
    """Build the streaming kernel for a fixed (static) sign pattern / tiling."""
    pos = tuple(j for j, s in enumerate(signs) if s > 0)
    neg = tuple(j for j, s in enumerate(signs) if s < 0)

    def kernel(p_ref, x_ref, o_ref):
        # Hoist the 13 folded scalars (and their splats) above the chunk loop.
        wf = [p_ref[j] for j in range(HIDDEN)]
        bf = [p_ref[HIDDEN + j] for j in range(HIDDEN)]
        b23 = p_ref[2 * HIDDEN]

        def chunk(c, carry):
            r0 = c * chunk_rows
            if not isinstance(r0, int):
                r0 = pl.multiple_of(r0, chunk_rows)
            x = x_ref[pl.ds(r0, chunk_rows), :]
            acc = None
            # positive-sign hidden units accumulate with +, negative with -
            for j in pos:
                h = jnp.maximum(x * wf[j] + bf[j], 0.0)
                acc = h if acc is None else acc + h
            for j in neg:
                h = jnp.maximum(x * wf[j] + bf[j], 0.0)
                acc = -h if acc is None else acc - h
            if acc is None:          # degenerate case: all fused weights zero
                y = jnp.full(x.shape, b23, dtype=o_ref.dtype)
            else:
                y = (acc + b23).astype(o_ref.dtype)
            o_ref[pl.ds(r0, chunk_rows), :] = y
            return carry

        if n_chunks == 1:
            chunk(0, 0)
        else:
            lax.fori_loop(0, n_chunks, chunk, 0, unroll=True)

    return kernel


def fold_params(params):
    """Fold the 1->6->6->1 MLP (m=1 path) into per-element scalar form.

    Returns (pvec, signs):
      pvec  = [wf(6) | bf(6) | b23(1)] float32, with |W3 @ W2| folded into fc1
      signs = static Python tuple in {+1, 0, -1} per hidden unit

    Requires concrete (non-traced) params: the signs become compile-time
    constants of the kernel.
    """
    (w1, b1), (w2, b2), (w3, b3) = params            # PyTorch layout: W is (out, in)
    w1v = jnp.asarray(w1, jnp.float32)[:, 0]                          # (6,)
    b1v = jnp.asarray(b1, jnp.float32)                                # (6,)
    w23 = (jnp.asarray(w3, jnp.float32) @ jnp.asarray(w2, jnp.float32))[0]   # (6,)
    b23 = (jnp.dot(jnp.asarray(b2, jnp.float32), jnp.asarray(w3, jnp.float32)[0])
           + jnp.asarray(b3, jnp.float32)[0])                         # scalar
    mag = jnp.abs(w23)
    signs = tuple(int(s) for s in np.sign(np.asarray(w23)))           # static
    pvec = jnp.concatenate([w1v * mag, b1v * mag, b23[None]])         # (13,)
    return pvec, signs


@functools.partial(jax.jit, static_argnums=(2,))
def net_forward(x, pvec, signs):
    """x: (B, 1) float32 -> (B, 1) float32.  Equivalent to Net.forward(x, m=1)."""
    B, in_dim = x.shape
    assert in_dim == 1

    rows = pl.cdiv(B, LANES)
    rem = B % LANES

    xf = x.reshape(-1)
    if rem:                                    # ragged: pad < 128 elements
        xf = jnp.pad(xf, (0, LANES - rem))
    x2d = xf.reshape(rows, LANES)              # B % 128 == 0: pure reshape, no copy

    # ---- tile sizing -------------------------------------------------------
    tile_rows = min(TILE_ROWS_MAX, _round_up(rows, 8))
    if rows <= tile_rows and rows >= 16:       # keep >= 2 grid steps for v7x megacore
        tile_rows = _round_up(pl.cdiv(rows, 2), 8)
    chunk_rows = min(CHUNK_ROWS, tile_rows)
    tile_rows = _round_up(tile_rows, chunk_rows)
    n_chunks = tile_rows // chunk_rows
    grid = (pl.cdiv(rows, tile_rows),)         # last block may be partial

    out2d = pl.pallas_call(
        _make_kernel(signs, n_chunks, chunk_rows),
        out_shape=jax.ShapeDtypeStruct((rows, LANES), jnp.float32),
        grid_spec=pltpu.PrefetchScalarGridSpec(
            num_scalar_prefetch=0,
            grid=grid,
            in_specs=[
                pl.BlockSpec(memory_space=pltpu.MemorySpace.SMEM),    # 13 folded params
                pl.BlockSpec((tile_rows, LANES), lambda i: (i, 0)),   # x tile
            ],
            out_specs=pl.BlockSpec((tile_rows, LANES), lambda i: (i, 0)),
        ),
        compiler_params=pltpu.CompilerParams(
            dimension_semantics=("parallel",)),
    )(pvec, x2d)

    if rem:
        return out2d.reshape(-1)[:B].reshape(B, 1)
    return out2d.reshape(B, 1)


def init_params(key):
    """Deterministic init mimicking PyTorch Linear default: U(-1/sqrt(fan_in), +)."""
    def linear(key, fan_in, fan_out):
        kw, kb = jax.random.split(key)
        bound = 1.0 / jnp.sqrt(fan_in)
        w = jax.random.uniform(kw, (fan_out, fan_in), jnp.float32, -bound, bound)
        b = jax.random.uniform(kb, (fan_out,), jnp.float32, -bound, bound)
        return w, b

    k1, k2, k3 = jax.random.split(key, 3)
    return (linear(k1, 1, 6), linear(k2, 6, 6), linear(k3, 6, 1))


def reference_forward(x, params):
    (w1, b1), (w2, b2), (w3, b3) = params
    h1 = jnp.maximum(x @ w1.T + b1, 0.0)
    h2 = h1 @ w2.T + b2
    return h2 @ w3.T + b3


if __name__ == "__main__":
    key = jax.random.PRNGKey(0)
    kx, kp = jax.random.split(key)

    params = init_params(kp)
    pvec, signs = fold_params(params)

    # Exercise the wrapper/kernel paths: tiny ragged batch, 128-divisible batch
    # (pure-reshape fast path), and a batch large enough for grid >= 2 plus the
    # unrolled in-kernel chunk loop.
    for B in (16, 256, 20000):
        xb = jax.random.normal(jax.random.fold_in(kx, B), (B, 1), dtype=jnp.float32)
        y = jax.block_until_ready(net_forward(xb, pvec, signs))
        y_ref = reference_forward(xb, params)
        assert y.shape == (B, 1)
        assert jnp.allclose(y, y_ref, atol=1e-5, rtol=1e-4), f"mismatch vs reference at B={B}"

    print("KERNEL_OK")
</pallas_src>

<mosaic_0001>
module attributes {stable_mosaic.version = 11 : i64} {
  func.func @kernel(%arg0: i32, %arg1: memref<13xf32, #tpu.memory_space<smem>>, %arg2: memref<8x128xf32, #tpu.memory_space<vmem>>, %arg3: memref<8x128xf32, #tpu.memory_space<vmem>>) attributes {dimension_semantics = [#tpu.dimension_semantics<parallel>], iteration_bounds = array<i64: 1>, scalar_prefetch = 0 : i64, scratch_operands = 0 : i64, tpu.core_type = #tpu.core_type<tc>, window_params = [{transform_indices = @transform_0, window_bounds = array<i64: 13>}, {transform_indices = @transform_1, window_bounds = array<i64: 8, 128>}, {transform_indices = @transform_2, window_bounds = array<i64: 8, 128>}]} {
    %c0 = arith.constant 0 : index
    %0 = memref.load %arg1[%c0] : memref<13xf32, #tpu.memory_space<smem>>
    %c1 = arith.constant 1 : index
    %1 = memref.load %arg1[%c1] : memref<13xf32, #tpu.memory_space<smem>>
    %c2 = arith.constant 2 : index
    %2 = memref.load %arg1[%c2] : memref<13xf32, #tpu.memory_space<smem>>
    %c3 = arith.constant 3 : index
    %3 = memref.load %arg1[%c3] : memref<13xf32, #tpu.memory_space<smem>>
    %c4 = arith.constant 4 : index
    %4 = memref.load %arg1[%c4] : memref<13xf32, #tpu.memory_space<smem>>
    %c5 = arith.constant 5 : index
    %5 = memref.load %arg1[%c5] : memref<13xf32, #tpu.memory_space<smem>>
    %c6 = arith.constant 6 : index
    %6 = memref.load %arg1[%c6] : memref<13xf32, #tpu.memory_space<smem>>
    %c7 = arith.constant 7 : index
    %7 = memref.load %arg1[%c7] : memref<13xf32, #tpu.memory_space<smem>>
    %c8 = arith.constant 8 : index
    %8 = memref.load %arg1[%c8] : memref<13xf32, #tpu.memory_space<smem>>
    %c9 = arith.constant 9 : index
    %9 = memref.load %arg1[%c9] : memref<13xf32, #tpu.memory_space<smem>>
    %c10 = arith.constant 10 : index
    %10 = memref.load %arg1[%c10] : memref<13xf32, #tpu.memory_space<smem>>
    %c11 = arith.constant 11 : index
    %11 = memref.load %arg1[%c11] : memref<13xf32, #tpu.memory_space<smem>>
    %c12 = arith.constant 12 : index
    %12 = memref.load %arg1[%c12] : memref<13xf32, #tpu.memory_space<smem>>
    %c0_0 = arith.constant 0 : index
    %c0_1 = arith.constant 0 : index
    %13 = vector.load %arg2[%c0_0, %c0_1] : memref<8x128xf32, #tpu.memory_space<vmem>>, vector<8x128xf32>
    %14 = vector.broadcast %0 : f32 to vector<8x128xf32>
    %15 = arith.mulf %13, %14 : vector<8x128xf32>
    %16 = vector.broadcast %6 : f32 to vector<8x128xf32>
    %17 = arith.addf %15, %16 : vector<8x128xf32>
    %cst = arith.constant 0.000000e+00 : f32
    %18 = vector.broadcast %cst : f32 to vector<8x128xf32>
    %19 = arith.maximumf %17, %18 : vector<8x128xf32>
    %20 = vector.broadcast %1 : f32 to vector<8x128xf32>
    %21 = arith.mulf %13, %20 : vector<8x128xf32>
    %22 = vector.broadcast %7 : f32 to vector<8x128xf32>
    %23 = arith.addf %21, %22 : vector<8x128xf32>
    %cst_2 = arith.constant 0.000000e+00 : f32
    %24 = vector.broadcast %cst_2 : f32 to vector<8x128xf32>
    %25 = arith.maximumf %23, %24 : vector<8x128xf32>
    %26 = arith.addf %19, %25 : vector<8x128xf32>
    %27 = vector.broadcast %2 : f32 to vector<8x128xf32>
    %28 = arith.mulf %13, %27 : vector<8x128xf32>
    %29 = vector.broadcast %8 : f32 to vector<8x128xf32>
    %30 = arith.addf %28, %29 : vector<8x128xf32>
    %cst_3 = arith.constant 0.000000e+00 : f32
    %31 = vector.broadcast %cst_3 : f32 to vector<8x128xf32>
    %32 = arith.maximumf %30, %31 : vector<8x128xf32>
    %33 = arith.subf %26, %32 : vector<8x128xf32>
    %34 = vector.broadcast %3 : f32 to vector<8x128xf32>
    %35 = arith.mulf %13, %34 : vector<8x128xf32>
    %36 = vector.broadcast %9 : f32 to vector<8x128xf32>
    %37 = arith.addf %35, %36 : vector<8x128xf32>
    %cst_4 = arith.constant 0.000000e+00 : f32
    %38 = vector.broadcast %cst_4 : f32 to vector<8x128xf32>
    %39 = arith.maximumf %37, %38 : vector<8x128xf32>
    %40 = arith.subf %33, %39 : vector<8x128xf32>
    %41 = vector.broadcast %4 : f32 to vector<8x128xf32>
    %42 = arith.mulf %13, %41 : vector<8x128xf32>
    %43 = vector.broadcast %10 : f32 to vector<8x128xf32>
    %44 = arith.addf %42, %43 : vector<8x128xf32>
    %cst_5 = arith.constant 0.000000e+00 : f32
    %45 = vector.broadcast %cst_5 : f32 to vector<8x128xf32>
    %46 = arith.maximumf %44, %45 : vector<8x128xf32>
    %47 = arith.subf %40, %46 : vector<8x128xf32>
    %48 = vector.broadcast %5 : f32 to vector<8x128xf32>
    %49 = arith.mulf %13, %48 : vector<8x128xf32>
    %50 = vector.broadcast %11 : f32 to vector<8x128xf32>
    %51 = arith.addf %49, %50 : vector<8x128xf32>
    %cst_6 = arith.constant 0.000000e+00 : f32
    %52 = vector.broadcast %cst_6 : f32 to vector<8x128xf32>
    %53 = arith.maximumf %51, %52 : vector<8x128xf32>
    %54 = arith.subf %47, %53 : vector<8x128xf32>
    %55 = vector.broadcast %12 : f32 to vector<8x128xf32>
    %56 = arith.addf %54, %55 : vector<8x128xf32>
    %c0_7 = arith.constant 0 : index
    %c0_8 = arith.constant 0 : index
    %57 = vector.load %arg3[%c0_7, %c0_8] : memref<8x128xf32, #tpu.memory_space<vmem>>, vector<8x128xf32>
    tpu.vector_store %arg3[%c0_7, %c0_8], %56 {strides = array<i32>} : memref<8x128xf32, #tpu.memory_space<vmem>>, vector<8x128xf32>,
    return
  }
  func.func @transform_0(%arg0: i32) -> i32 {
    %c0_i32 = arith.constant 0 : i32
    %c0_i32_0 = arith.constant 0 : i32
    return %c0_i32 : i32
  }
  func.func @transform_1(%arg0: i32) -> (i32, i32) {
    %c0_i32 = arith.constant 0 : i32
    %c0_i32_0 = arith.constant 0 : i32
    return %arg0, %c0_i32 : i32, i32
  }
  func.func @transform_2(%arg0: i32) -> (i32, i32) {
    %c0_i32 = arith.constant 0 : i32
    %c0_i32_0 = arith.constant 0 : i32
    return %arg0, %c0_i32 : i32, i32
  }
}

</mosaic_0001>

<llo_original>
// kernel: net_forward.1
$region0: #{net_forward.1}
  #allocation0 [shape = 'u32[]', space=smem, size = 0x4, offset = 0x4, fixed_abs, tag = 'smem constant byte address 0x4 - core index']
  #allocation1 [shape = 'u32[144,128]{1,0:T(1,128)}', space=vmem, size = 0x12000, scoped, tag = 'internal scratch']
  %s0 = inlined_call_operand.vmem [shape: f32[13], index: 0, kind: input, shape index: {}]
  %s1 = inlined_call_operand.vmem [shape: f32[1,128], index: 1, kind: input, shape index: {}]
  %s2 = inlined_call_operand.vmem [shape: f32[1,128], index: 2, kind: output, shape index: {}]
  %s3 = sld [smem:[#allocation0]]
  $region52: #{net_forward.1} parent=0
    _
  %s5 = ssub.s32 1, %s3
  %s6 = scalar_select 0, %s5, %s3
  $region1: #{net_forward.1} parent=0
    #allocation2 [shape = 'u8[512]{0}', space=smem, size = 0x200, scoped, tag = 'input window, operand 0, single buffered']
    #allocation3 [shape = 's32[1]{0}', space=sflag, size = 0x4, scoped, tag = 'scoped memory for net_forward.1']
    #allocation4 [shape = 'u8[4096]{0}', space=vmem, size = 0x1000, scoped, tag = 'output window, operand 0, single buffered']
    %7 = vsyncpa [#allocation3], 0
    // Predicated region
    $region2: #{net_forward.1} parent=1 // pred_check
      _
    $region3: #{net_forward.1} parent=1 // pred_check_branch
      %9 = sbr.rel (0) target = $region5
    $region4: #{net_forward.1} parent=1 // pred_region
      %s11 = ssub.s32 16, 16
      %12 = vsyncadd [#allocation3], %s11
      %s14 = sshll.u32 %s0, 4
      %s15 = int_to_ptr.vmem [resolvable:$true] %s14
      %17 = dma.vmem_to_smem %s15, 16, [#allocation2], [#allocation3]
    $region5: #{net_forward.1} parent=1 // pred_fallthru
      _
    // Predicated region
    $region6: #{net_forward.1} parent=1 // pred_check
      _
    $region7: #{net_forward.1} parent=1 // pred_check_branch
      %19 = sbr.rel (0) target = $region9
    $region8: #{net_forward.1} parent=1 // pred_region
      _
    $region9: #{net_forward.1} parent=1 // pred_fallthru
      _
    // Predicated region
    $region10: #{net_forward.1} parent=1 // pred_check
      _
    $region11: #{net_forward.1} parent=1 // pred_check_branch
      %21 = sbr.rel (0) target = $region13
    $region12: #{net_forward.1} parent=1 // pred_region
      %22 = dma.done [#allocation3], 16
    $region13: #{net_forward.1} parent=1 // pred_fallthru
      _
    %23 = sfence
    %s24 = sld [smem:[#allocation2]]
    %s25 = sld [smem:[#allocation2 + $0x1]]
    %s26 = sld [smem:[#allocation2 + $0x2]]
    %s27 = sld [smem:[#allocation2 + $0x3]]
    %s28 = sld [smem:[#allocation2 + $0x4]]
    %s29 = sld [smem:[#allocation2 + $0x5]]
    %s30 = sld [smem:[#allocation2 + $0x6]]
    %s31 = sld [smem:[#allocation2 + $0x7]]
    %s32 = sld [smem:[#allocation2 + $0x8]]
    %s33 = sld [smem:[#allocation2 + $0x9]]
    %s34 = sld [smem:[#allocation2 + $0xa]]
    %s35 = sld [smem:[#allocation2 + $0xb]]
    %s36 = sld [smem:[#allocation2 + $0xc]]
    %v37 = vld [vmem:[%s1] sm:$0xff]
    %v38 = vstv %s24
    %v39 = vmul.f32 %v37, %v38
    %v40 = vstv %s30
    %v41 = vadd.f32 %v39, %v40
    %v42 = vmax.f32 %v41, 0.0
    %v43 = vstv %s25
    %v44 = vmul.f32 %v37, %v43
    %v45 = vstv %s31
    %v46 = vadd.f32 %v44, %v45
    %v47 = vmax.f32 %v46, 0.0
    %v48 = vadd.f32 %v42, %v47
    %v49 = vstv %s26
    %v50 = vmul.f32 %v37, %v49
    %v51 = vstv %s32
    %v52 = vadd.f32 %v50, %v51
    %v53 = vmax.f32 %v52, 0.0
    %v54 = vsub.f32 %v48, %v53
    %v55 = vstv %s27
    %v56 = vmul.f32 %v37, %v55
    %v57 = vstv %s33
    %v58 = vadd.f32 %v56, %v57
    %v59 = vmax.f32 %v58, 0.0
    %v60 = vsub.f32 %v54, %v59
    %v61 = vstv %s28
    %v62 = vmul.f32 %v37, %v61
    %v63 = vstv %s34
    %v64 = vadd.f32 %v62, %v63
    %v65 = vmax.f32 %v64, 0.0
    %v66 = vsub.f32 %v60, %v65
    %v67 = vstv %s29
    %v68 = vmul.f32 %v37, %v67
    %v69 = vstv %s35
    %v70 = vadd.f32 %v68, %v69
    %v71 = vmax.f32 %v70, 0.0
    %v72 = vsub.f32 %v66, %v71
    %v73 = vstv %s36
    %v74 = vadd.f32 %v72, %v73
    %75 = vst [vmem:[#allocation4] sm:$0xff] %v74
    // Predicated region
    $region14: #{net_forward.1} parent=1 // pred_check
      _
    $region15: #{net_forward.1} parent=1 // pred_check_branch
      %77 = sbr.rel (0) target = $region17
    $region16: #{net_forward.1} parent=1 // pred_region
      // Predicated region
      $region18: #{net_forward.1} parent=16 // pred_check
        _
      $region19: #{net_forward.1} parent=16 // pred_check_branch
        %79 = sbr.rel (0) target = $region21
      $region20: #{net_forward.1} parent=16 // pred_region
        // Predicated region
        $region22: #{net_forward.1} parent=20 // pred_check
          _
        $region23: #{net_forward.1} parent=20 // pred_check_branch
          %81 = sbr.rel target = $region25
        $region24: #{net_forward.1} parent=20 // pred_region
          // Predicated region
          $region37: #{net_forward.1} parent=24 // pred_check
            _
          $region38: #{net_forward.1} parent=24 // pred_check_branch
            %96 = sbr.rel (0) target = $region40
          $region39: #{net_forward.1} parent=24 // pred_region
            loop: start=0, step=1, limit=1
            $region41: #{net_forward.1} parent=39 // loop_pre_header
              _
            $region42: #{net_forward.1} parent=39 // loop_header
              %s99 = sphi 0, %s103
              %p100 = scmp.ge.s32.totalorder %s99, 1
              %s104 = sphi [#allocation4], [#allocation4]
              %s105 = sphi %s2, %s2
            $region43: #{net_forward.1} parent=39 // loop_header_branch
              %102 = sbr.rel (%p100) target = $region47
            $region44: #{net_forward.1} parent=39 // loop_body
              %v106 = vld [vmem:[%s104] sm:$0x1]
              %107 = vst [vmem:[%s105] sm:$0x1] %v106
            $region45: #{net_forward.1} parent=39 // loop_footer
              %s103 = sadd.s32 1, %s99
            $region46: #{net_forward.1} parent=39 // loop_footer_branch
              %98 = sbr.rel target = $region42
            $region47: #{net_forward.1} parent=39 // loop_exit
              _
          $region40: #{net_forward.1} parent=24 // pred_fallthru
            _
        $region25: #{net_forward.1} parent=20 // pred_fallthru
          _
        // Predicated region
        $region26: #{net_forward.1} parent=20 // pred_check
          _
        $region27: #{net_forward.1} parent=20 // pred_check_branch
          %83 = sbr.rel (0) target = $region29
        $region28: #{net_forward.1} parent=20 // pred_region
          loop: start=0, step=1, limit=1
          $region30: #{net_forward.1} parent=28 // loop_pre_header
            _
          $region31: #{net_forward.1} parent=28 // loop_header
            %s86 = sphi 0, %s90
            %p87 = scmp.ge.s32.totalorder %s86, 1
            %s91 = sphi [#allocation4], [#allocation4]
            %s92 = sphi %s2, %s2
          $region32: #{net_forward.1} parent=28 // loop_header_branch
            %89 = sbr.rel (%p87) target = $region36
          $region33: #{net_forward.1} parent=28 // loop_body
            %v93 = vld [vmem:[%s91] sm:$0x1]
            %94 = vst [vmem:[%s92] sm:$0x1] %v93
          $region34: #{net_forward.1} parent=28 // loop_footer
            %s90 = sadd.s32 1, %s86
          $region35: #{net_forward.1} parent=28 // loop_footer_branch
            %85 = sbr.rel target = $region31
          $region36: #{net_forward.1} parent=28 // loop_exit
            _
        $region29: #{net_forward.1} parent=20 // pred_fallthru
          _
      $region21: #{net_forward.1} parent=16 // pred_fallthru
        _
      %108 = vnop
    $region17: #{net_forward.1} parent=1 // pred_fallthru
      _
    // Predicated region
    $region48: #{net_forward.1} parent=1 // pred_check
      _
    $region49: #{net_forward.1} parent=1 // pred_check_branch
      %110 = sbr.rel (0) target = $region51
    $region50: #{net_forward.1} parent=1 // pred_region
      _
    $region51: #{net_forward.1} parent=1 // pred_fallthru
      _
    %111 = vsyncpa [#allocation3], 1

</llo_original>
